<compile_context>
chip_gen: v5e
topology: v5e:2x2
jax: 0.10.0
libtpu: 0.0.40
codegen_flags: <defaults>
</compile_context>

<pallas_src>
import functools

import jax
import jax.numpy as jnp
from jax.experimental import pallas as pl
from jax.experimental.pallas import tpu as pltpu

SIZES = (5, 9, 13)                 # module-default pooling sizes (odd, increasing)
HALF = tuple(k // 2 for k in SIZES)
NP = len(SIZES) + 1                # identity + one branch per size
PMAX = max(HALF)                   # 6: largest zero-pad needed


def _guard_lanes(W):
    """Zero guard on each side of the flat slab.

    Multiple of 128 so every scratch *store* is lane-aligned and unmasked,
    and >= PMAX*W so row shifts never leave the buffer.
    """
    return max(128, -(-(PMAX * W) // 128) * 128)


def _spp_kernel(x_ref, o_ref, scr_ref, *, H, W):
    """One (batch, channel-tile) grid step.

    x_ref   : (1, TC, H*W)         input tile, flattened spatial on lanes
    o_ref   : (1, NP, TC, H*W)     [identity, pool5, pool9, pool13]
    scr_ref : (TC, G + H*W + G)    zero-guarded flat slab (VMEM scratch)
    """
    HW = H * W
    G = _guard_lanes(W)

    x = x_ref[0]                                   # (TC, HW)
    tc = x.shape[0]
    dt = x.dtype

    # identity branch (lane-dense store)
    o_ref[0, 0] = x

    # (Re)zero the guards and park x in the slab interior.  All stores are
    # lane-aligned (G % 128 == 0) and unmasked.  Guards are re-zeroed every
    # step so correctness never depends on how the parallel grid is split
    # across TensorCores.
    zg = jnp.zeros((tc, G), dt)
    scr_ref[:, 0:G] = zg
    scr_ref[:, G + HW:G + HW + G] = zg
    scr_ref[:, G:G + HW] = x

    # Row id of a flat index.  Float-only math (exact for this integer range,
    # the +0.5 gives margin against rounding) -- no vector int div/rem needed.
    inv_w = 1.0 / W
    idx = jax.lax.broadcasted_iota(jnp.int32, (1, HW), 1).astype(jnp.float32)

    def row_of(v):
        return jnp.floor((v + 0.5) * inv_w)

    row0 = row_of(idx)
    keep = {d: row_of(idx + d) == row0
            for d in range(-PMAX, PMAX + 1) if d != 0}

    # Read the guarded slab ONCE; all column shifts below are value slices.
    slab = scr_ref[...]                            # (TC, 2G + HW)

    def col_shift(d):
        # value[i] = x_flat[i + d] if (i + d) stays in the same image row,
        # else 0 (== the zero padding a k x k / pad k//2 max pool sees).
        v = slab[:, G + d:G + d + HW]
        return jnp.where(keep[d], v, jnp.zeros_like(v))

    # ---- horizontal pass: running max over columns, shared incrementally
    # ---- across branches (the 13-window extends the 9-window extends the 5).
    hmax = []
    m = x
    prev = 0
    for p in HALF:                                 # 2, 4, 6
        for d in range(prev + 1, p + 1):
            m = jnp.maximum(m, col_shift(d))
            m = jnp.maximum(m, col_shift(-d))
        hmax.append(m)
        prev = p

    # ---- vertical pass: per branch, running max over +-p rows.  Row shifts
    # ---- are whole multiples of W lanes, so the zero guards alone provide
    # ---- exact zero padding (no masks needed).  The slab is reused for each
    # ---- branch's horizontal result (x is no longer needed).
    for bi, p in enumerate(HALF):
        scr_ref[:, G:G + HW] = hmax[bi]
        slab_k = scr_ref[...]
        acc = hmax[bi]
        for dr in range(1, p + 1):
            dn = slab_k[:, G + dr * W:G + dr * W + HW]
            up = slab_k[:, G - dr * W:G - dr * W + HW]
            acc = jnp.maximum(acc, jnp.maximum(dn, up))
        o_ref[0, bi + 1] = acc                     # lane-dense store


def _vmem_budget():
    """(channel-tile budget, scoped-VMEM limit) with per-generation awareness."""
    cap = 64 * 1024 * 1024
    try:
        cap = int(pltpu.get_tpu_info().vmem_capacity_bytes)
    except Exception:
        pass                                       # conservative fallback
    budget = min(max(cap // 4, 8 * 1024 * 1024), 24 * 1024 * 1024)
    limit = min(3 * cap // 4, 64 * 1024 * 1024)
    return budget, limit


def _pick_channel_tile(B, C, H, W, dtype, budget_bytes):
    """Largest legal channel tile whose estimated per-step VMEM footprint
    (double-buffered I/O + slab scratch + live value temporaries) fits."""
    bpe = jnp.dtype(dtype).itemsize
    HW = H * W
    G = _guard_lanes(W)

    def footprint(tc):
        io = 2 * (1 + NP) * tc * HW * bpe          # double-buffered in + out
        scratch = tc * (HW + 2 * G) * bpe          # guarded flat slab
        temps = 8 * tc * HW * bpe                  # live (tc, HW) value temps
        return io + scratch + temps

    # block's second-to-last dim must be a multiple of 8 sublanes or all of C
    legal = [d for d in range(1, C + 1)
             if C % d == 0 and (d % 8 == 0 or d == C)]
    fitting = [d for d in legal if footprint(d) <= budget_bytes] or [min(legal)]
    # keep >= 2 grid steps when possible so both TensorCores (v7x) get work
    multi = [d for d in fitting if B * (C // d) >= 2]
    return max(multi or fitting)


def spp(x, *, tc=None):
    """x: (B, C, H, W) -> (B, C*(len(SIZES)+1), H, W) (torch.cat(dim=1) order)."""
    B, C, H, W = x.shape
    HW = H * W
    budget, vmem_limit = _vmem_budget()
    if tc is None:
        tc = _pick_channel_tile(B, C, H, W, x.dtype, budget)
    assert C % tc == 0 and (tc % 8 == 0 or tc == C)
    G = _guard_lanes(W)
    bpe = jnp.dtype(x.dtype).itemsize

    kernel = functools.partial(_spp_kernel, H=H, W=W)
    out = pl.pallas_call(
        kernel,
        out_shape=jax.ShapeDtypeStruct((B, NP, C, HW), x.dtype),
        grid_spec=pltpu.PrefetchScalarGridSpec(
            num_scalar_prefetch=0,
            grid=(B, C // tc),
            in_specs=[pl.BlockSpec((1, tc, HW), lambda b, c: (b, c, 0))],
            out_specs=pl.BlockSpec((1, NP, tc, HW), lambda b, c: (b, 0, c, 0)),
            scratch_shapes=[pltpu.VMEM((tc, HW + 2 * G), x.dtype)],
        ),
        compiler_params=pltpu.CompilerParams(
            dimension_semantics=("parallel", "parallel"),
            vmem_limit_bytes=vmem_limit),
        cost_estimate=pl.CostEstimate(
            flops=48 * B * C * H * W,              # ~36 maxes + 12 selects / elem
            transcendentals=0,
            bytes_accessed=(1 + NP) * B * C * H * W * bpe),
    )(x.reshape(B, C, HW))
    # (B, NP, C, H*W) -> (B, NP*C, H, W)  ==  torch.cat([x, p5, p9, p13], dim=1)
    return out.reshape(B, NP * C, H, W)


def spp_ref(x):
    """Pure-JAX reference: zero-pad then max-reduce-window (stride 1)."""
    outs = [x]
    for k in SIZES:
        p = k // 2
        xp = jnp.pad(x, ((0, 0), (0, 0), (p, p), (p, p)))
        pooled = jax.lax.reduce_window(
            xp, -jnp.inf, jax.lax.max,
            window_dimensions=(1, 1, k, k),
            window_strides=(1, 1, 1, 1),
            padding="VALID")
        outs.append(pooled)
    return jnp.concatenate(outs, axis=1)


if __name__ == "__main__":
    key = jax.random.PRNGKey(0)
    x = jax.random.normal(key, (2, 4, 16, 16), dtype=jnp.float32)

    y = jax.block_until_ready(spp(x))
    y_ref = spp_ref(x)

    assert y.shape == (2, 4 * NP, 16, 16), y.shape
    assert jnp.allclose(y, y_ref, atol=1e-6), float(jnp.max(jnp.abs(y - y_ref)))
    print("KERNEL_OK")
</pallas_src>

<mosaic_0001>
module attributes {stable_mosaic.version = 11 : i64} {
  func.func @_spp_kernel(%arg0: i32, %arg1: i32, %arg2: memref<1x4x256xf32, #tpu.memory_space<vmem>>, %arg3: memref<1x4x4x256xf32, #tpu.memory_space<vmem>>, %arg4: memref<4x512xf32, #tpu.memory_space<vmem>>) attributes {dimension_semantics = [#tpu.dimension_semantics<parallel>, #tpu.dimension_semantics<parallel>], iteration_bounds = array<i64: 2, 1>, scalar_prefetch = 0 : i64, scratch_operands = 1 : i64, tpu.core_type = #tpu.core_type<tc>, window_params = [{transform_indices = @transform_0, window_bounds = array<i64: 1, 4, 256>}, {transform_indices = @transform_1, window_bounds = array<i64: 1, 4, 4, 256>}]} {
    %c0 = arith.constant 0 : index
    %c0_0 = arith.constant 0 : index
    %c0_1 = arith.constant 0 : index
    %0 = vector.load %arg2[%c0, %c0_0, %c0_1] : memref<1x4x256xf32, #tpu.memory_space<vmem>>, vector<1x4x256xf32>
    %1 = vector.shape_cast %0 : vector<1x4x256xf32> to vector<4x256xf32>
    %c0_2 = arith.constant 0 : index
    %c0_3 = arith.constant 0 : index
    %c0_4 = arith.constant 0 : index
    %c0_5 = arith.constant 0 : index
    %2 = vector.load %arg3[%c0_2, %c0_3, %c0_4, %c0_5] : memref<1x4x4x256xf32, #tpu.memory_space<vmem>>, vector<1x1x4x256xf32>
    %3 = vector.shape_cast %2 : vector<1x1x4x256xf32> to vector<4x256xf32>
    %4 = vector.shape_cast %1 : vector<4x256xf32> to vector<1x1x4x256xf32>
    tpu.vector_store %arg3[%c0_2, %c0_3, %c0_4, %c0_5], %4 {strides = array<i32>} : memref<1x4x4x256xf32, #tpu.memory_space<vmem>>, vector<1x1x4x256xf32>,
    %cst = arith.constant 0.000000e+00 : f32
    %5 = vector.broadcast %cst : f32 to vector<4x128xf32>
    %c0_6 = arith.constant 0 : index
    %c0_7 = arith.constant 0 : index
    %6 = vector.load %arg4[%c0_6, %c0_7] : memref<4x512xf32, #tpu.memory_space<vmem>>, vector<4x128xf32>
    tpu.vector_store %arg4[%c0_6, %c0_7], %5 {strides = array<i32>} : memref<4x512xf32, #tpu.memory_space<vmem>>, vector<4x128xf32>,
    %c0_8 = arith.constant 0 : index
    %c384 = arith.constant 384 : index
    %7 = vector.load %arg4[%c0_8, %c384] : memref<4x512xf32, #tpu.memory_space<vmem>>, vector<4x128xf32>
    tpu.vector_store %arg4[%c0_8, %c384], %5 {strides = array<i32>} : memref<4x512xf32, #tpu.memory_space<vmem>>, vector<4x128xf32>,
    %c0_9 = arith.constant 0 : index
    %c128 = arith.constant 128 : index
    %8 = vector.load %arg4[%c0_9, %c128] : memref<4x512xf32, #tpu.memory_space<vmem>>, vector<4x256xf32>
    tpu.vector_store %arg4[%c0_9, %c128], %1 {strides = array<i32>} : memref<4x512xf32, #tpu.memory_space<vmem>>, vector<4x256xf32>,
    %9 = tpu.iota {dimensions = array<i32: 1>} : vector<1x256xi32>
    %10 = arith.sitofp %9 : vector<1x256xi32> to vector<1x256xf32>
    %cst_10 = arith.constant 5.000000e-01 : f32
    %11 = vector.broadcast %cst_10 : f32 to vector<1x256xf32>
    %12 = arith.addf %10, %11 : vector<1x256xf32>
    %cst_11 = arith.constant 6.250000e-02 : f32
    %13 = vector.broadcast %cst_11 : f32 to vector<1x256xf32>
    %14 = arith.mulf %12, %13 : vector<1x256xf32>
    %15 = math.floor %14 : vector<1x256xf32>
    %cst_12 = arith.constant -6.000000e+00 : f32
    %16 = vector.broadcast %cst_12 : f32 to vector<1x256xf32>
    %17 = arith.addf %10, %16 : vector<1x256xf32>
    %cst_13 = arith.constant 5.000000e-01 : f32
    %18 = vector.broadcast %cst_13 : f32 to vector<1x256xf32>
    %19 = arith.addf %17, %18 : vector<1x256xf32>
    %cst_14 = arith.constant 6.250000e-02 : f32
    %20 = vector.broadcast %cst_14 : f32 to vector<1x256xf32>
    %21 = arith.mulf %19, %20 : vector<1x256xf32>
    %22 = math.floor %21 : vector<1x256xf32>
    %23 = arith.cmpf oeq, %22, %15 : vector<1x256xf32>
    %cst_15 = arith.constant -5.000000e+00 : f32
    %24 = vector.broadcast %cst_15 : f32 to vector<1x256xf32>
    %25 = arith.addf %10, %24 : vector<1x256xf32>
    %cst_16 = arith.constant 5.000000e-01 : f32
    %26 = vector.broadcast %cst_16 : f32 to vector<1x256xf32>
    %27 = arith.addf %25, %26 : vector<1x256xf32>
    %cst_17 = arith.constant 6.250000e-02 : f32
    %28 = vector.broadcast %cst_17 : f32 to vector<1x256xf32>
    %29 = arith.mulf %27, %28 : vector<1x256xf32>
    %30 = math.floor %29 : vector<1x256xf32>
    %31 = arith.cmpf oeq, %30, %15 : vector<1x256xf32>
    %cst_18 = arith.constant -4.000000e+00 : f32
    %32 = vector.broadcast %cst_18 : f32 to vector<1x256xf32>
    %33 = arith.addf %10, %32 : vector<1x256xf32>
    %cst_19 = arith.constant 5.000000e-01 : f32
    %34 = vector.broadcast %cst_19 : f32 to vector<1x256xf32>
    %35 = arith.addf %33, %34 : vector<1x256xf32>
    %cst_20 = arith.constant 6.250000e-02 : f32
    %36 = vector.broadcast %cst_20 : f32 to vector<1x256xf32>
    %37 = arith.mulf %35, %36 : vector<1x256xf32>
    %38 = math.floor %37 : vector<1x256xf32>
    %39 = arith.cmpf oeq, %38, %15 : vector<1x256xf32>
    %cst_21 = arith.constant -3.000000e+00 : f32
    %40 = vector.broadcast %cst_21 : f32 to vector<1x256xf32>
    %41 = arith.addf %10, %40 : vector<1x256xf32>
    %cst_22 = arith.constant 5.000000e-01 : f32
    %42 = vector.broadcast %cst_22 : f32 to vector<1x256xf32>
    %43 = arith.addf %41, %42 : vector<1x256xf32>
    %cst_23 = arith.constant 6.250000e-02 : f32
    %44 = vector.broadcast %cst_23 : f32 to vector<1x256xf32>
    %45 = arith.mulf %43, %44 : vector<1x256xf32>
    %46 = math.floor %45 : vector<1x256xf32>
    %47 = arith.cmpf oeq, %46, %15 : vector<1x256xf32>
    %cst_24 = arith.constant -2.000000e+00 : f32
    %48 = vector.broadcast %cst_24 : f32 to vector<1x256xf32>
    %49 = arith.addf %10, %48 : vector<1x256xf32>
    %cst_25 = arith.constant 5.000000e-01 : f32
    %50 = vector.broadcast %cst_25 : f32 to vector<1x256xf32>
    %51 = arith.addf %49, %50 : vector<1x256xf32>
    %cst_26 = arith.constant 6.250000e-02 : f32
    %52 = vector.broadcast %cst_26 : f32 to vector<1x256xf32>
    %53 = arith.mulf %51, %52 : vector<1x256xf32>
    %54 = math.floor %53 : vector<1x256xf32>
    %55 = arith.cmpf oeq, %54, %15 : vector<1x256xf32>
    %cst_27 = arith.constant -1.000000e+00 : f32
    %56 = vector.broadcast %cst_27 : f32 to vector<1x256xf32>
    %57 = arith.addf %10, %56 : vector<1x256xf32>
    %cst_28 = arith.constant 5.000000e-01 : f32
    %58 = vector.broadcast %cst_28 : f32 to vector<1x256xf32>
    %59 = arith.addf %57, %58 : vector<1x256xf32>
    %cst_29 = arith.constant 6.250000e-02 : f32
    %60 = vector.broadcast %cst_29 : f32 to vector<1x256xf32>
    %61 = arith.mulf %59, %60 : vector<1x256xf32>
    %62 = math.floor %61 : vector<1x256xf32>
    %63 = arith.cmpf oeq, %62, %15 : vector<1x256xf32>
    %cst_30 = arith.constant 1.000000e+00 : f32
    %64 = vector.broadcast %cst_30 : f32 to vector<1x256xf32>
    %65 = arith.addf %10, %64 : vector<1x256xf32>
    %cst_31 = arith.constant 5.000000e-01 : f32
    %66 = vector.broadcast %cst_31 : f32 to vector<1x256xf32>
    %67 = arith.addf %65, %66 : vector<1x256xf32>
    %cst_32 = arith.constant 6.250000e-02 : f32
    %68 = vector.broadcast %cst_32 : f32 to vector<1x256xf32>
    %69 = arith.mulf %67, %68 : vector<1x256xf32>
    %70 = math.floor %69 : vector<1x256xf32>
    %71 = arith.cmpf oeq, %70, %15 : vector<1x256xf32>
    %cst_33 = arith.constant 2.000000e+00 : f32
    %72 = vector.broadcast %cst_33 : f32 to vector<1x256xf32>
    %73 = arith.addf %10, %72 : vector<1x256xf32>
    %cst_34 = arith.constant 5.000000e-01 : f32
    %74 = vector.broadcast %cst_34 : f32 to vector<1x256xf32>
    %75 = arith.addf %73, %74 : vector<1x256xf32>
    %cst_35 = arith.constant 6.250000e-02 : f32
    %76 = vector.broadcast %cst_35 : f32 to vector<1x256xf32>
    %77 = arith.mulf %75, %76 : vector<1x256xf32>
    %78 = math.floor %77 : vector<1x256xf32>
    %79 = arith.cmpf oeq, %78, %15 : vector<1x256xf32>
    %cst_36 = arith.constant 3.000000e+00 : f32
    %80 = vector.broadcast %cst_36 : f32 to vector<1x256xf32>
    %81 = arith.addf %10, %80 : vector<1x256xf32>
    %cst_37 = arith.constant 5.000000e-01 : f32
    %82 = vector.broadcast %cst_37 : f32 to vector<1x256xf32>
    %83 = arith.addf %81, %82 : vector<1x256xf32>
    %cst_38 = arith.constant 6.250000e-02 : f32
    %84 = vector.broadcast %cst_38 : f32 to vector<1x256xf32>
    %85 = arith.mulf %83, %84 : vector<1x256xf32>
    %86 = math.floor %85 : vector<1x256xf32>
    %87 = arith.cmpf oeq, %86, %15 : vector<1x256xf32>
    %cst_39 = arith.constant 4.000000e+00 : f32
    %88 = vector.broadcast %cst_39 : f32 to vector<1x256xf32>
    %89 = arith.addf %10, %88 : vector<1x256xf32>
    %cst_40 = arith.constant 5.000000e-01 : f32
    %90 = vector.broadcast %cst_40 : f32 to vector<1x256xf32>
    %91 = arith.addf %89, %90 : vector<1x256xf32>
    %cst_41 = arith.constant 6.250000e-02 : f32
    %92 = vector.broadcast %cst_41 : f32 to vector<1x256xf32>
    %93 = arith.mulf %91, %92 : vector<1x256xf32>
    %94 = math.floor %93 : vector<1x256xf32>
    %95 = arith.cmpf oeq, %94, %15 : vector<1x256xf32>
    %cst_42 = arith.constant 5.000000e+00 : f32
    %96 = vector.broadcast %cst_42 : f32 to vector<1x256xf32>
    %97 = arith.addf %10, %96 : vector<1x256xf32>
    %cst_43 = arith.constant 5.000000e-01 : f32
    %98 = vector.broadcast %cst_43 : f32 to vector<1x256xf32>
    %99 = arith.addf %97, %98 : vector<1x256xf32>
    %cst_44 = arith.constant 6.250000e-02 : f32
    %100 = vector.broadcast %cst_44 : f32 to vector<1x256xf32>
    %101 = arith.mulf %99, %100 : vector<1x256xf32>
    %102 = math.floor %101 : vector<1x256xf32>
    %103 = arith.cmpf oeq, %102, %15 : vector<1x256xf32>
    %cst_45 = arith.constant 6.000000e+00 : f32
    %104 = vector.broadcast %cst_45 : f32 to vector<1x256xf32>
    %105 = arith.addf %10, %104 : vector<1x256xf32>
    %cst_46 = arith.constant 5.000000e-01 : f32
    %106 = vector.broadcast %cst_46 : f32 to vector<1x256xf32>
    %107 = arith.addf %105, %106 : vector<1x256xf32>
    %cst_47 = arith.constant 6.250000e-02 : f32
    %108 = vector.broadcast %cst_47 : f32 to vector<1x256xf32>
    %109 = arith.mulf %107, %108 : vector<1x256xf32>
    %110 = math.floor %109 : vector<1x256xf32>
    %111 = arith.cmpf oeq, %110, %15 : vector<1x256xf32>
    %c0_48 = arith.constant 0 : index
    %c0_49 = arith.constant 0 : index
    %112 = vector.load %arg4[%c0_48, %c0_49] : memref<4x512xf32, #tpu.memory_space<vmem>>, vector<4x512xf32>
    %113 = vector.extract_strided_slice %112 {offsets = [0, 129], sizes = [4, 256], strides = [1, 1]} : vector<4x512xf32> to vector<4x256xf32>
    %cst_50 = arith.constant 0.000000e+00 : f32
    %114 = vector.broadcast %cst_50 : f32 to vector<4x256xf32>
    %115 = vector.shape_cast %71 : vector<1x256xi1> to vector<1x256xi1>
    %116 = vector.broadcast %115 : vector<1x256xi1> to vector<4x256xi1>
    %117 = arith.select %116, %113, %114 : vector<4x256xi1>, vector<4x256xf32>
    %118 = arith.maximumf %1, %117 : vector<4x256xf32>
    %119 = vector.extract_strided_slice %112 {offsets = [0, 127], sizes = [4, 256], strides = [1, 1]} : vector<4x512xf32> to vector<4x256xf32>
    %cst_51 = arith.constant 0.000000e+00 : f32
    %120 = vector.broadcast %cst_51 : f32 to vector<4x256xf32>
    %121 = vector.shape_cast %63 : vector<1x256xi1> to vector<1x256xi1>
    %122 = vector.broadcast %121 : vector<1x256xi1> to vector<4x256xi1>
    %123 = arith.select %122, %119, %120 : vector<4x256xi1>, vector<4x256xf32>
    %124 = arith.maximumf %118, %123 : vector<4x256xf32>
    %125 = vector.extract_strided_slice %112 {offsets = [0, 130], sizes = [4, 256], strides = [1, 1]} : vector<4x512xf32> to vector<4x256xf32>
    %cst_52 = arith.constant 0.000000e+00 : f32
    %126 = vector.broadcast %cst_52 : f32 to vector<4x256xf32>
    %127 = vector.shape_cast %79 : vector<1x256xi1> to vector<1x256xi1>
    %128 = vector.broadcast %127 : vector<1x256xi1> to vector<4x256xi1>
    %129 = arith.select %128, %125, %126 : vector<4x256xi1>, vector<4x256xf32>
    %130 = arith.maximumf %124, %129 : vector<4x256xf32>
    %131 = vector.extract_strided_slice %112 {offsets = [0, 126], sizes = [4, 256], strides = [1, 1]} : vector<4x512xf32> to vector<4x256xf32>
    %cst_53 = arith.constant 0.000000e+00 : f32
    %132 = vector.broadcast %cst_53 : f32 to vector<4x256xf32>
    %133 = vector.shape_cast %55 : vector<1x256xi1> to vector<1x256xi1>
    %134 = vector.broadcast %133 : vector<1x256xi1> to vector<4x256xi1>
    %135 = arith.select %134, %131, %132 : vector<4x256xi1>, vector<4x256xf32>
    %136 = arith.maximumf %130, %135 : vector<4x256xf32>
    %137 = vector.extract_strided_slice %112 {offsets = [0, 131], sizes = [4, 256], strides = [1, 1]} : vector<4x512xf32> to vector<4x256xf32>
    %cst_54 = arith.constant 0.000000e+00 : f32
    %138 = vector.broadcast %cst_54 : f32 to vector<4x256xf32>
    %139 = vector.shape_cast %87 : vector<1x256xi1> to vector<1x256xi1>
    %140 = vector.broadcast %139 : vector<1x256xi1> to vector<4x256xi1>
    %141 = arith.select %140, %137, %138 : vector<4x256xi1>, vector<4x256xf32>
    %142 = arith.maximumf %136, %141 : vector<4x256xf32>
    %143 = vector.extract_strided_slice %112 {offsets = [0, 125], sizes = [4, 256], strides = [1, 1]} : vector<4x512xf32> to vector<4x256xf32>
    %cst_55 = arith.constant 0.000000e+00 : f32
    %144 = vector.broadcast %cst_55 : f32 to vector<4x256xf32>
    %145 = vector.shape_cast %47 : vector<1x256xi1> to vector<1x256xi1>
    %146 = vector.broadcast %145 : vector<1x256xi1> to vector<4x256xi1>
    %147 = arith.select %146, %143, %144 : vector<4x256xi1>, vector<4x256xf32>
    %148 = arith.maximumf %142, %147 : vector<4x256xf32>
    %149 = vector.extract_strided_slice %112 {offsets = [0, 132], sizes = [4, 256], strides = [1, 1]} : vector<4x512xf32> to vector<4x256xf32>
    %cst_56 = arith.constant 0.000000e+00 : f32
    %150 = vector.broadcast %cst_56 : f32 to vector<4x256xf32>
    %151 = vector.shape_cast %95 : vector<1x256xi1> to vector<1x256xi1>
    %152 = vector.broadcast %151 : vector<1x256xi1> to vector<4x256xi1>
    %153 = arith.select %152, %149, %150 : vector<4x256xi1>, vector<4x256xf32>
    %154 = arith.maximumf %148, %153 : vector<4x256xf32>
    %155 = vector.extract_strided_slice %112 {offsets = [0, 124], sizes = [4, 256], strides = [1, 1]} : vector<4x512xf32> to vector<4x256xf32>
    %cst_57 = arith.constant 0.000000e+00 : f32
    %156 = vector.broadcast %cst_57 : f32 to vector<4x256xf32>
    %157 = vector.shape_cast %39 : vector<1x256xi1> to vector<1x256xi1>
    %158 = vector.broadcast %157 : vector<1x256xi1> to vector<4x256xi1>
    %159 = arith.select %158, %155, %156 : vector<4x256xi1>, vector<4x256xf32>
    %160 = arith.maximumf %154, %159 : vector<4x256xf32>
    %161 = vector.extract_strided_slice %112 {offsets = [0, 133], sizes = [4, 256], strides = [1, 1]} : vector<4x512xf32> to vector<4x256xf32>
    %cst_58 = arith.constant 0.000000e+00 : f32
    %162 = vector.broadcast %cst_58 : f32 to vector<4x256xf32>
    %163 = vector.shape_cast %103 : vector<1x256xi1> to vector<1x256xi1>
    %164 = vector.broadcast %163 : vector<1x256xi1> to vector<4x256xi1>
    %165 = arith.select %164, %161, %162 : vector<4x256xi1>, vector<4x256xf32>
    %166 = arith.maximumf %160, %165 : vector<4x256xf32>
    %167 = vector.extract_strided_slice %112 {offsets = [0, 123], sizes = [4, 256], strides = [1, 1]} : vector<4x512xf32> to vector<4x256xf32>
    %cst_59 = arith.constant 0.000000e+00 : f32
    %168 = vector.broadcast %cst_59 : f32 to vector<4x256xf32>
    %169 = vector.shape_cast %31 : vector<1x256xi1> to vector<1x256xi1>
    %170 = vector.broadcast %169 : vector<1x256xi1> to vector<4x256xi1>
    %171 = arith.select %170, %167, %168 : vector<4x256xi1>, vector<4x256xf32>
    %172 = arith.maximumf %166, %171 : vector<4x256xf32>
    %173 = vector.extract_strided_slice %112 {offsets = [0, 134], sizes = [4, 256], strides = [1, 1]} : vector<4x512xf32> to vector<4x256xf32>
    %cst_60 = arith.constant 0.000000e+00 : f32
    %174 = vector.broadcast %cst_60 : f32 to vector<4x256xf32>
    %175 = vector.shape_cast %111 : vector<1x256xi1> to vector<1x256xi1>
    %176 = vector.broadcast %175 : vector<1x256xi1> to vector<4x256xi1>
    %177 = arith.select %176, %173, %174 : vector<4x256xi1>, vector<4x256xf32>
    %178 = arith.maximumf %172, %177 : vector<4x256xf32>
    %179 = vector.extract_strided_slice %112 {offsets = [0, 122], sizes = [4, 256], strides = [1, 1]} : vector<4x512xf32> to vector<4x256xf32>
    %cst_61 = arith.constant 0.000000e+00 : f32
    %180 = vector.broadcast %cst_61 : f32 to vector<4x256xf32>
    %181 = vector.shape_cast %23 : vector<1x256xi1> to vector<1x256xi1>
    %182 = vector.broadcast %181 : vector<1x256xi1> to vector<4x256xi1>
    %183 = arith.select %182, %179, %180 : vector<4x256xi1>, vector<4x256xf32>
    %184 = arith.maximumf %178, %183 : vector<4x256xf32>
    %c0_62 = arith.constant 0 : index
    %c128_63 = arith.constant 128 : index
    %185 = vector.load %arg4[%c0_62, %c128_63] : memref<4x512xf32, #tpu.memory_space<vmem>>, vector<4x256xf32>
    tpu.vector_store %arg4[%c0_62, %c128_63], %136 {strides = array<i32>} : memref<4x512xf32, #tpu.memory_space<vmem>>, vector<4x256xf32>,
    %c0_64 = arith.constant 0 : index
    %c0_65 = arith.constant 0 : index
    %186 = vector.load %arg4[%c0_64, %c0_65] : memref<4x512xf32, #tpu.memory_space<vmem>>, vector<4x512xf32>
    %187 = vector.extract_strided_slice %186 {offsets = [0, 144], sizes = [4, 256], strides = [1, 1]} : vector<4x512xf32> to vector<4x256xf32>
    %188 = vector.extract_strided_slice %186 {offsets = [0, 112], sizes = [4, 256], strides = [1, 1]} : vector<4x512xf32> to vector<4x256xf32>
    %189 = arith.maximumf %187, %188 : vector<4x256xf32>
    %190 = arith.maximumf %136, %189 : vector<4x256xf32>
    %191 = vector.extract_strided_slice %186 {offsets = [0, 160], sizes = [4, 256], strides = [1, 1]} : vector<4x512xf32> to vector<4x256xf32>
    %192 = vector.extract_strided_slice %186 {offsets = [0, 96], sizes = [4, 256], strides = [1, 1]} : vector<4x512xf32> to vector<4x256xf32>
    %193 = arith.maximumf %191, %192 : vector<4x256xf32>
    %194 = arith.maximumf %190, %193 : vector<4x256xf32>
    %c0_66 = arith.constant 0 : index
    %c1 = arith.constant 1 : index
    %c0_67 = arith.constant 0 : index
    %c0_68 = arith.constant 0 : index
    %195 = vector.load %arg3[%c0_66, %c1, %c0_67, %c0_68] : memref<1x4x4x256xf32, #tpu.memory_space<vmem>>, vector<1x1x4x256xf32>
    %196 = vector.shape_cast %195 : vector<1x1x4x256xf32> to vector<4x256xf32>
    %197 = vector.shape_cast %194 : vector<4x256xf32> to vector<1x1x4x256xf32>
    tpu.vector_store %arg3[%c0_66, %c1, %c0_67, %c0_68], %197 {strides = array<i32>} : memref<1x4x4x256xf32, #tpu.memory_space<vmem>>, vector<1x1x4x256xf32>,
    %c0_69 = arith.constant 0 : index
    %c128_70 = arith.constant 128 : index
    %198 = vector.load %arg4[%c0_69, %c128_70] : memref<4x512xf32, #tpu.memory_space<vmem>>, vector<4x256xf32>
    tpu.vector_store %arg4[%c0_69, %c128_70], %160 {strides = array<i32>} : memref<4x512xf32, #tpu.memory_space<vmem>>, vector<4x256xf32>,
    %c0_71 = arith.constant 0 : index
    %c0_72 = arith.constant 0 : index
    %199 = vector.load %arg4[%c0_71, %c0_72] : memref<4x512xf32, #tpu.memory_space<vmem>>, vector<4x512xf32>
    %200 = vector.extract_strided_slice %199 {offsets = [0, 144], sizes = [4, 256], strides = [1, 1]} : vector<4x512xf32> to vector<4x256xf32>
    %201 = vector.extract_strided_slice %199 {offsets = [0, 112], sizes = [4, 256], strides = [1, 1]} : vector<4x512xf32> to vector<4x256xf32>
    %202 = arith.maximumf %200, %201 : vector<4x256xf32>
    %203 = arith.maximumf %160, %202 : vector<4x256xf32>
    %204 = vector.extract_strided_slice %199 {offsets = [0, 160], sizes = [4, 256], strides = [1, 1]} : vector<4x512xf32> to vector<4x256xf32>
    %205 = vector.extract_strided_slice %199 {offsets = [0, 96], sizes = [4, 256], strides = [1, 1]} : vector<4x512xf32> to vector<4x256xf32>
    %206 = arith.maximumf %204, %205 : vector<4x256xf32>
    %207 = arith.maximumf %203, %206 : vector<4x256xf32>
    %208 = vector.extract_strided_slice %199 {offsets = [0, 176], sizes = [4, 256], strides = [1, 1]} : vector<4x512xf32> to vector<4x256xf32>
    %209 = vector.extract_strided_slice %199 {offsets = [0, 80], sizes = [4, 256], strides = [1, 1]} : vector<4x512xf32> to vector<4x256xf32>
    %210 = arith.maximumf %208, %209 : vector<4x256xf32>
    %211 = arith.maximumf %207, %210 : vector<4x256xf32>
    %212 = vector.extract_strided_slice %199 {offsets = [0, 192], sizes = [4, 256], strides = [1, 1]} : vector<4x512xf32> to vector<4x256xf32>
    %213 = vector.extract_strided_slice %199 {offsets = [0, 64], sizes = [4, 256], strides = [1, 1]} : vector<4x512xf32> to vector<4x256xf32>
    %214 = arith.maximumf %212, %213 : vector<4x256xf32>
    %215 = arith.maximumf %211, %214 : vector<4x256xf32>
    %c0_73 = arith.constant 0 : index
    %c2 = arith.constant 2 : index
    %c0_74 = arith.constant 0 : index
    %c0_75 = arith.constant 0 : index
    %216 = vector.load %arg3[%c0_73, %c2, %c0_74, %c0_75] : memref<1x4x4x256xf32, #tpu.memory_space<vmem>>, vector<1x1x4x256xf32>
    %217 = vector.shape_cast %216 : vector<1x1x4x256xf32> to vector<4x256xf32>
    %218 = vector.shape_cast %215 : vector<4x256xf32> to vector<1x1x4x256xf32>
    tpu.vector_store %arg3[%c0_73, %c2, %c0_74, %c0_75], %218 {strides = array<i32>} : memref<1x4x4x256xf32, #tpu.memory_space<vmem>>, vector<1x1x4x256xf32>,
    %c0_76 = arith.constant 0 : index
    %c128_77 = arith.constant 128 : index
    %219 = vector.load %arg4[%c0_76, %c128_77] : memref<4x512xf32, #tpu.memory_space<vmem>>, vector<4x256xf32>
    tpu.vector_store %arg4[%c0_76, %c128_77], %184 {strides = array<i32>} : memref<4x512xf32, #tpu.memory_space<vmem>>, vector<4x256xf32>,
    %c0_78 = arith.constant 0 : index
    %c0_79 = arith.constant 0 : index
    %220 = vector.load %arg4[%c0_78, %c0_79] : memref<4x512xf32, #tpu.memory_space<vmem>>, vector<4x512xf32>
    %221 = vector.extract_strided_slice %220 {offsets = [0, 144], sizes = [4, 256], strides = [1, 1]} : vector<4x512xf32> to vector<4x256xf32>
    %222 = vector.extract_strided_slice %220 {offsets = [0, 112], sizes = [4, 256], strides = [1, 1]} : vector<4x512xf32> to vector<4x256xf32>
    %223 = arith.maximumf %221, %222 : vector<4x256xf32>
    %224 = arith.maximumf %184, %223 : vector<4x256xf32>
    %225 = vector.extract_strided_slice %220 {offsets = [0, 160], sizes = [4, 256], strides = [1, 1]} : vector<4x512xf32> to vector<4x256xf32>
    %226 = vector.extract_strided_slice %220 {offsets = [0, 96], sizes = [4, 256], strides = [1, 1]} : vector<4x512xf32> to vector<4x256xf32>
    %227 = arith.maximumf %225, %226 : vector<4x256xf32>
    %228 = arith.maximumf %224, %227 : vector<4x256xf32>
    %229 = vector.extract_strided_slice %220 {offsets = [0, 176], sizes = [4, 256], strides = [1, 1]} : vector<4x512xf32> to vector<4x256xf32>
    %230 = vector.extract_strided_slice %220 {offsets = [0, 80], sizes = [4, 256], strides = [1, 1]} : vector<4x512xf32> to vector<4x256xf32>
    %231 = arith.maximumf %229, %230 : vector<4x256xf32>
    %232 = arith.maximumf %228, %231 : vector<4x256xf32>
    %233 = vector.extract_strided_slice %220 {offsets = [0, 192], sizes = [4, 256], strides = [1, 1]} : vector<4x512xf32> to vector<4x256xf32>
    %234 = vector.extract_strided_slice %220 {offsets = [0, 64], sizes = [4, 256], strides = [1, 1]} : vector<4x512xf32> to vector<4x256xf32>
    %235 = arith.maximumf %233, %234 : vector<4x256xf32>
    %236 = arith.maximumf %232, %235 : vector<4x256xf32>
    %237 = vector.extract_strided_slice %220 {offsets = [0, 208], sizes = [4, 256], strides = [1, 1]} : vector<4x512xf32> to vector<4x256xf32>
    %238 = vector.extract_strided_slice %220 {offsets = [0, 48], sizes = [4, 256], strides = [1, 1]} : vector<4x512xf32> to vector<4x256xf32>
    %239 = arith.maximumf %237, %238 : vector<4x256xf32>
    %240 = arith.maximumf %236, %239 : vector<4x256xf32>
    %241 = vector.extract_strided_slice %220 {offsets = [0, 224], sizes = [4, 256], strides = [1, 1]} : vector<4x512xf32> to vector<4x256xf32>
    %242 = vector.extract_strided_slice %220 {offsets = [0, 32], sizes = [4, 256], strides = [1, 1]} : vector<4x512xf32> to vector<4x256xf32>
    %243 = arith.maximumf %241, %242 : vector<4x256xf32>
    %244 = arith.maximumf %240, %243 : vector<4x256xf32>
    %c0_80 = arith.constant 0 : index
    %c3 = arith.constant 3 : index
    %c0_81 = arith.constant 0 : index
    %c0_82 = arith.constant 0 : index
    %245 = vector.load %arg3[%c0_80, %c3, %c0_81, %c0_82] : memref<1x4x4x256xf32, #tpu.memory_space<vmem>>, vector<1x1x4x256xf32>
    %246 = vector.shape_cast %245 : vector<1x1x4x256xf32> to vector<4x256xf32>
    %247 = vector.shape_cast %244 : vector<4x256xf32> to vector<1x1x4x256xf32>
    tpu.vector_store %arg3[%c0_80, %c3, %c0_81, %c0_82], %247 {strides = array<i32>} : memref<1x4x4x256xf32, #tpu.memory_space<vmem>>, vector<1x1x4x256xf32>,
    return
  }
  func.func @transform_0(%arg0: i32, %arg1: i32) -> (i32, i32, i32) {
    %c0_i32 = arith.constant 0 : i32
    %c0_i32_0 = arith.constant 0 : i32
    return %arg0, %arg1, %c0_i32 : i32, i32, i32
  }
  func.func @transform_1(%arg0: i32, %arg1: i32) -> (i32, i32, i32, i32) {
    %c0_i32 = arith.constant 0 : i32
    %c0_i32_0 = arith.constant 0 : i32
    %c0_i32_1 = arith.constant 0 : i32
    return %arg0, %c0_i32, %arg1, %c0_i32_0 : i32, i32, i32, i32
  }
}

</mosaic_0001>

<llo_original>
// kernel: tpu_custom_call.1
$region0: #{tpu_custom_call.1}
  #allocation0 [shape = 'u32[]', space=smem, size = 0x4, offset = 0x4, fixed_abs, tag = 'smem constant byte address 0x4 - core index']
  #allocation1 [shape = 'u32[72,128]{1,0:T(1,128)}', space=vmem, size = 0x9000, scoped, tag = 'internal scratch']
  #allocation2 [shape = 'f32[4,512]{1,0:T(4,128)}', space=vmem, size = 0x2000, scoped, tag = 'scratch operand']
  %s0 = inlined_call_operand.hbm [shape: f32[2,4,256], index: 0, kind: input, shape index: {}]
  %s1 = inlined_call_operand.hbm [shape: f32[2,4,4,256], index: 1, kind: output, shape index: {}]
  %s2 = sld [smem:[#allocation0]]
  $region41: #{tpu_custom_call.1} parent=0
    _
  %s4 = ssub.s32 1, %s2
  %s5 = scalar_select 0, %s4, %s2
  $region1: #{tpu_custom_call.1} parent=0
    #allocation3 [shape = 'u8[8192]{0}', space=vmem, size = 0x2000, scoped, tag = 'input window, operand 0']
    #allocation4 [shape = 's32[2]{0}', space=sflag, size = 0x8, scoped, tag = 'scoped memory for tpu_custom_call.1']
    #allocation5 [shape = 's32[2]{0}', space=sflag, size = 0x8, scoped, tag = 'scoped memory for tpu_custom_call.1']
    #allocation6 [shape = 'u8[32768]{0}', space=vmem, size = 0x8000, scoped, tag = 'output window, operand 0']
    %6 = vsyncpa [#allocation4], 0
    %s7 = scalar_lea.sflag [#allocation4], 1
    %8 = vsyncpa %s7, 0
    %9 = vsyncpa [#allocation5], 0
    %s10 = scalar_lea.sflag [#allocation5], 1
    %11 = vsyncpa %s10, 0
    loop: start=0, step=1, limit=4
    $region2: #{tpu_custom_call.1} parent=1 // loop_pre_header
      _
    $region3: #{tpu_custom_call.1} parent=1 // loop_header
      %s13 = sphi 0, %s17
      %p14 = scmp.ge.s32.totalorder %s13, 4
      %s20 = sphi 0, %s32
      %s21 = sphi 0, %s28
      %s22 = sphi 0, %s20
      %s23 = sphi 0, %s21
      %s24 = sphi 0, %s22
      %s25 = sphi 0, %s23
      %s37 = sphi 0, %s39
      %s40 = sphi 0, %s37
      %s41 = sphi 0, %s40
      %s57 = sphi 0, %s41
      %s65 = sphi 0, %s67
      %s68 = sphi 0, %s65
      %s69 = sphi 0, %s68
      %s85 = sphi 0, %s69
    $region4: #{tpu_custom_call.1} parent=1 // loop_header_branch
      %16 = sbr.rel (%p14) target = $region8
    $region5: #{tpu_custom_call.1} parent=1 // loop_body
      %s18 = ssub.s32 %s13, 1
      %s19 = ssub.s32 %s13, 2
      %s26 = sadd.s32 1, %s21
      %p27 = scmp.ge.s32.totalorder %s26, 1
      %s28 = scalar_select %p27, 0, %s26
      %s29 = sadd.s32 1, %s20
      %s30 = scalar_select %p27, %s29, %s20
      %p31 = scmp.ge.s32.totalorder %s30, 2
      %s32 = scalar_select %p31, 0, %s30
      %s33 = ssub.s32 %s20, %s32
      %s34 = ssub.s32 %s21, %s28
      %s35 = sor.u32 %s33, %s34
      %p36 = scmp.eq.s32.totalorder %s35, 0
      %s38 = sadd.s32 %s37, 1
      %s39 = scalar_select %p36, %s37, %s38
      %p42 = pneg %p36
      %p43 = scmp.eq.s32.totalorder %s13, 1
      %p44 = por %p42, %p43
      %p45 = scmp.ne.s32.totalorder %s37, %s40
      %p46 = scmp.eq.s32.totalorder %s13, 0
      %p47 = por %p45, %p46
      %p48 = scmp.ne.s32.totalorder %s37, %s40
      %p49 = scmp.eq.s32.totalorder %s18, 1
      %p50 = por %p48, %p49
      %p51 = scmp.ne.s32.totalorder %s40, %s41
      %p52 = scmp.eq.s32.totalorder %s18, 0
      %p53 = por %p51, %p52
      %p54 = scmp.ne.s32.totalorder %s40, %s41
      %p55 = scmp.eq.s32.totalorder %s19, 1
      %p56 = por %p54, %p55
      %p58 = scmp.ne.s32.totalorder %s41, %s57
      %p59 = scmp.eq.s32.totalorder %s19, 0
      %p60 = por %p58, %p59
      %s61 = ssub.s32 %s20, %s32
      %s62 = ssub.s32 %s21, %s28
      %s63 = sor.u32 %s61, %s62
      %p64 = scmp.eq.s32.totalorder %s63, 0
      %s66 = sadd.s32 %s65, 1
      %s67 = scalar_select %p64, %s65, %s66
      %p70 = pneg %p64
      %p71 = scmp.eq.s32.totalorder %s13, 1
      %p72 = por %p70, %p71
      %p73 = scmp.ne.s32.totalorder %s65, %s68
      %p74 = scmp.eq.s32.totalorder %s13, 0
      %p75 = por %p73, %p74
      %p76 = scmp.ne.s32.totalorder %s65, %s68
      %p77 = scmp.eq.s32.totalorder %s18, 1
      %p78 = por %p76, %p77
      %p79 = scmp.ne.s32.totalorder %s68, %s69
      %p80 = scmp.eq.s32.totalorder %s18, 0
      %p81 = por %p79, %p80
      %p82 = scmp.ne.s32.totalorder %s68, %s69
      %p83 = scmp.eq.s32.totalorder %s19, 1
      %p84 = por %p82, %p83
      %p86 = scmp.ne.s32.totalorder %s69, %s85
      %p87 = scmp.eq.s32.totalorder %s19, 0
      %p88 = por %p86, %p87
      %p89 = scmp.le.s32.totalorder 1, %s13
      %p90 = scmp.lt.s32.totalorder %s13, 3
      %p91 = pnand %p89, %p90
      %p92 = pneg %p91
      // Predicated region
      $region9: #{tpu_custom_call.1} parent=5 // pred_check
        _
      $region10: #{tpu_custom_call.1} parent=5 // pred_check_branch
        %94 = sbr.rel (%p91) target = $region12
      $region11: #{tpu_custom_call.1} parent=5 // pred_region
        %s95 = ssub.s32 %s13, 1
      $region12: #{tpu_custom_call.1} parent=5 // pred_fallthru
        _
      %p96 = scmp.lt.s32.totalorder %s13, 2
      // Predicated region
      $region13: #{tpu_custom_call.1} parent=5 // pred_check
        %p97 = pneg %p96
      $region14: #{tpu_custom_call.1} parent=5 // pred_check_branch
        %99 = sbr.rel (%p97) target = $region16
      $region15: #{tpu_custom_call.1} parent=5 // pred_region
        // Predicated region
        $region17: #{tpu_custom_call.1} parent=15 // pred_check
          %p100 = pneg %p47
        $region18: #{tpu_custom_call.1} parent=15 // pred_check_branch
          %102 = sbr.rel (%p100) target = $region20
        $region19: #{tpu_custom_call.1} parent=15 // pred_region
          %s103 = sand.u32 %s37, 1
          %s104 = scalar_lea.sflag [#allocation4], %s103
          %s105 = sand.u32 %s37, 1
          %s106 = smul.addr %s105, 8
          %s107 = scalar_lea.vmem [#allocation3], %s106
          %109 = vsyncadd %s104, 0
          %s110 = smul.addr %s21, 2
          %s111 = smul.addr %s20, 2
          %s112 = sadd.s32 %s110, %s111
          %s113 = smul.addr %s112, 4
          %s114 = scalar_lea.hbm %s0, %s113
          %s116 = sshll.u32 %s114, 4
          %s117 = int_to_ptr.hbm [resolvable:$true] %s116
          %s118 = sshll.u32 %s107, 4
          %s119 = int_to_ptr.vmem [resolvable:$true] %s118
          %121 = dma.hbm_to_vmem [thread:$0]  %s117, 128, %s119, %s104
        $region20: #{tpu_custom_call.1} parent=15 // pred_fallthru
          _
      $region16: #{tpu_custom_call.1} parent=5 // pred_fallthru
        _
      %p122 = scmp.le.s32.totalorder 1, %s13
      %p123 = scmp.lt.s32.totalorder %s13, 3
      %p124 = pnand %p122, %p123
      %p125 = pneg %p124
      // Predicated region
      $region21: #{tpu_custom_call.1} parent=5 // pred_check
        _
      $region22: #{tpu_custom_call.1} parent=5 // pred_check_branch
        %127 = sbr.rel (%p124) target = $region24
      $region23: #{tpu_custom_call.1} parent=5 // pred_region
        %s128 = ssub.s32 %s13, 1
        %s129 = sand.u32 %s40, 1
        %s130 = scalar_lea.sflag [#allocation4], %s129
        %s131 = sand.u32 %s40, 1
        %s132 = smul.addr %s131, 8
        %s133 = scalar_lea.vmem [#allocation3], %s132
        // Predicated region
        $region25: #{tpu_custom_call.1} parent=23 // pred_check
          %p134 = pneg %p53
        $region26: #{tpu_custom_call.1} parent=23 // pred_check_branch
          %136 = sbr.rel (%p134) target = $region28
        $region27: #{tpu_custom_call.1} parent=23 // pred_region
          %138 = dma.done %s130, 128
        $region28: #{tpu_custom_call.1} parent=23 // pred_fallthru
          _
        %s139 = sand.u32 %s40, 1
        %s140 = scalar_lea.sflag [#allocation4], %s139
        %s141 = sand.u32 %s40, 1
        %s142 = smul.addr %s141, 8
        %s143 = scalar_lea.vmem [#allocation3], %s142
        %p144 = pneg %p53
        %p145 = pneg %p50
        %p146 = pneg %p81
        %p147 = pneg %p78
        %s148 = sand.u32 %s68, 1
        %s149 = scalar_lea.sflag [#allocation5], %s148
        %s150 = sand.u32 %s68, 1
        %s151 = smul.addr %s150, 32
        %s152 = scalar_lea.vmem [#allocation6], %s151
        %v153 = vld [vmem:[%s133] sm:$0xff]
        %154 = vst [vmem:[%s152] sm:$0xff] %v153
        %155 = vst [vmem:[#allocation2] sm:$0xf] 0.0
        %156 = vst [vmem:[#allocation2 + $0xc] sm:$0xf] 0.0
        %157 = vst [vmem:[#allocation2 + $0x4] sm:$0xff] %v153
        %v158 = vlaneseq
        %v159 = vand.u32 %v158, 127
        %v160 = vadd.s32 %v159, 128
        %v161 = vcvt.s32.f32 %v159
        %v162 = vcvt.s32.f32 %v160
        %v163 = vadd.f32 %v161, 0.5
        %v164 = vadd.f32 %v162, 0.5
        %v165 = vmul.f32 %v163, 0.0625
        %v166 = vmul.f32 %v164, 0.0625
        %v167 = vfloor.f32 %v165
        %v168 = vfloor.f32 %v166
        %v169 = vadd.f32 %v161, -6.0
        %v170 = vadd.f32 %v162, -6.0
        %v171 = vadd.f32 %v169, 0.5
        %v172 = vadd.f32 %v170, 0.5
        %v173 = vmul.f32 %v171, 0.0625
        %v174 = vmul.f32 %v172, 0.0625
        %v175 = vfloor.f32 %v173
        %v176 = vfloor.f32 %v174
        %vm177 = vcmp.eq.f32.partialorder %v175, %v167
        %vm178 = vcmp.eq.f32.partialorder %v176, %v168
        %v179 = vadd.f32 %v161, -5.0
        %v180 = vadd.f32 %v162, -5.0
        %v181 = vadd.f32 %v179, 0.5
        %v182 = vadd.f32 %v180, 0.5
        %v183 = vmul.f32 %v181, 0.0625
        %v184 = vmul.f32 %v182, 0.0625
        %v185 = vfloor.f32 %v183
        %v186 = vfloor.f32 %v184
        %vm187 = vcmp.eq.f32.partialorder %v185, %v167
        %vm188 = vcmp.eq.f32.partialorder %v186, %v168
        %v189 = vadd.f32 %v161, -4.0
        %v190 = vadd.f32 %v162, -4.0
        %v191 = vadd.f32 %v189, 0.5
        %v192 = vadd.f32 %v190, 0.5
        %v193 = vmul.f32 %v191, 0.0625
        %v194 = vmul.f32 %v192, 0.0625
        %v195 = vfloor.f32 %v193
        %v196 = vfloor.f32 %v194
        %vm197 = vcmp.eq.f32.partialorder %v195, %v167
        %vm198 = vcmp.eq.f32.partialorder %v196, %v168
        %v199 = vadd.f32 %v161, -3.0
        %v200 = vadd.f32 %v162, -3.0
        %v201 = vadd.f32 %v199, 0.5
        %v202 = vadd.f32 %v200, 0.5
        %v203 = vmul.f32 %v201, 0.0625
        %v204 = vmul.f32 %v202, 0.0625
        %v205 = vfloor.f32 %v203
        %v206 = vfloor.f32 %v204
        %vm207 = vcmp.eq.f32.partialorder %v205, %v167
        %vm208 = vcmp.eq.f32.partialorder %v206, %v168
        %v209 = vadd.f32 %v161, -2.0
        %v210 = vadd.f32 %v162, -2.0
        %v211 = vadd.f32 %v209, 0.5
        %v212 = vadd.f32 %v210, 0.5
        %v213 = vmul.f32 %v211, 0.0625
        %v214 = vmul.f32 %v212, 0.0625
        %v215 = vfloor.f32 %v213
        %v216 = vfloor.f32 %v214
        %vm217 = vcmp.eq.f32.partialorder %v215, %v167
        %vm218 = vcmp.eq.f32.partialorder %v216, %v168
        %v219 = vadd.f32 %v161, -1.0
        %v220 = vadd.f32 %v162, -1.0
        %v221 = vadd.f32 %v219, 0.5
        %v222 = vadd.f32 %v220, 0.5
        %v223 = vmul.f32 %v221, 0.0625
        %v224 = vmul.f32 %v222, 0.0625
        %v225 = vfloor.f32 %v223
        %v226 = vfloor.f32 %v224
        %vm227 = vcmp.eq.f32.partialorder %v225, %v167
        %vm228 = vcmp.eq.f32.partialorder %v226, %v168
        %v229 = vadd.f32 %v161, 1.0
        %v230 = vadd.f32 %v162, 1.0
        %v231 = vadd.f32 %v229, 0.5
        %v232 = vadd.f32 %v230, 0.5
        %v233 = vmul.f32 %v231, 0.0625
        %v234 = vmul.f32 %v232, 0.0625
        %v235 = vfloor.f32 %v233
        %v236 = vfloor.f32 %v234
        %vm237 = vcmp.eq.f32.partialorder %v235, %v167
        %vm238 = vcmp.eq.f32.partialorder %v236, %v168
        %v239 = vadd.f32 %v161, 2.0
        %v240 = vadd.f32 %v162, 2.0
        %v241 = vadd.f32 %v239, 0.5
        %v242 = vadd.f32 %v240, 0.5
        %v243 = vmul.f32 %v241, 0.0625
        %v244 = vmul.f32 %v242, 0.0625
        %v245 = vfloor.f32 %v243
        %v246 = vfloor.f32 %v244
        %vm247 = vcmp.eq.f32.partialorder %v245, %v167
        %vm248 = vcmp.eq.f32.partialorder %v246, %v168
        %v249 = vadd.f32 %v161, 3.0
        %v250 = vadd.f32 %v162, 3.0
        %v251 = vadd.f32 %v249, 0.5
        %v252 = vadd.f32 %v250, 0.5
        %v253 = vmul.f32 %v251, 0.0625
        %v254 = vmul.f32 %v252, 0.0625
        %v255 = vfloor.f32 %v253
        %v256 = vfloor.f32 %v254
        %vm257 = vcmp.eq.f32.partialorder %v255, %v167
        %vm258 = vcmp.eq.f32.partialorder %v256, %v168
        %v259 = vadd.f32 %v161, 4.0
        %v260 = vadd.f32 %v162, 4.0
        %v261 = vadd.f32 %v259, 0.5
        %v262 = vadd.f32 %v260, 0.5
        %v263 = vmul.f32 %v261, 0.0625
        %v264 = vmul.f32 %v262, 0.0625
        %v265 = vfloor.f32 %v263
        %v266 = vfloor.f32 %v264
        %vm267 = vcmp.eq.f32.partialorder %v265, %v167
        %vm268 = vcmp.eq.f32.partialorder %v266, %v168
        %v269 = vadd.f32 %v161, 5.0
        %v270 = vadd.f32 %v162, 5.0
        %v271 = vadd.f32 %v269, 0.5
        %v272 = vadd.f32 %v270, 0.5
        %v273 = vmul.f32 %v271, 0.0625
        %v274 = vmul.f32 %v272, 0.0625
        %v275 = vfloor.f32 %v273
        %v276 = vfloor.f32 %v274
        %vm277 = vcmp.eq.f32.partialorder %v275, %v167
        %vm278 = vcmp.eq.f32.partialorder %v276, %v168
        %v279 = vadd.f32 %v161, 6.0
        %v280 = vadd.f32 %v162, 6.0
        %v281 = vadd.f32 %v279, 0.5
        %v282 = vadd.f32 %v280, 0.5
        %v283 = vmul.f32 %v281, 0.0625
        %v284 = vmul.f32 %v282, 0.0625
        %v285 = vfloor.f32 %v283
        %v286 = vfloor.f32 %v284
        %vm287 = vcmp.eq.f32.partialorder %v285, %v167
        %vm288 = vcmp.eq.f32.partialorder %v286, %v168
        %v289 = vld [vmem:[#allocation2] sm:$0xff]
        %v290 = vld [vmem:[#allocation2 + $0x8] sm:$0xff]
        %v291 = vsel %vm237, 1, 0
        %v292 = vsel %vm238, 1, 0
        %vm293 = vcmp.eq.s32.totalorder %v291, 1
        %vm294 = vcmp.eq.s32.totalorder %v292, 1
        %297 = vst [vmem:[#allocation1] ss:$2 sm:$0xff] %v289
        %s298 = scalar_lea.vmem [#allocation1], 16
        %299 = vst [vmem:[%s298] ss:$2 sm:$0xff] %v290
        %v300 = vld.sshfl [vmem:[#allocation1 + $0x8] sm:$0xff pattern:$0x75316420]
        %v301 = vld.sshfl [vmem:[#allocation1 + $0x10] sm:$0xff pattern:$0x75316420]
        %v302 = vld.sshfl [vmem:[#allocation1 + $0x18] sm:$0xff pattern:$0x75316420]
        %303 = vrot.lane.b32.xlu0 %v300, 127
        %v304 = vpop.permute.xlu0 %303
        %305 = vrot.lane.b32.xlu0 %v301, 127
        %v306 = vpop.permute.xlu0 %305
        %307 = vrot.lane.b32.xlu0 %v302, 127
        %v308 = vpop.permute.xlu0 %307
        %vm309 = vcmask 1039360
        %v310 = vsel %vm309, %v304, %v306
        %v311 = vsel %vm309, %v306, %v308
        %v314 = vsel %vm293, %v310, 0.0
        %v315 = vsel %vm294, %v311, 0.0
        %v318 = vrot.slane %v315, 4
        %vm319 = vcmask 1043456
        %v320 = vsel %vm319, %v314, %v318
        %v322 = vmax.f32 %v153, %v320
        %v323 = vsel %vm227, 1, 0
        %v324 = vsel %vm228, 1, 0
        %vm325 = vcmp.eq.s32.totalorder %v323, 1
        %vm326 = vcmp.eq.s32.totalorder %v324, 1
        %327 = vst [vmem:[#allocation1] ss:$2 sm:$0xff] %v289
        %s328 = scalar_lea.vmem [#allocation1], 16
        %329 = vst [vmem:[%s328] ss:$2 sm:$0xff] %v290
        %v330 = vld.sshfl [vmem:[#allocation1] sm:$0xff pattern:$0x75316420]
        %v331 = vld.sshfl [vmem:[#allocation1 + $0x8] sm:$0xff pattern:$0x75316420]
        %v332 = vld.sshfl [vmem:[#allocation1 + $0x10] sm:$0xff pattern:$0x75316420]
        %333 = vrot.lane.b32.xlu0 %v330, 1
        %v334 = vpop.permute.xlu0 %333
        %335 = vrot.lane.b32.xlu0 %v331, 1
        %v336 = vpop.permute.xlu0 %335
        %337 = vrot.lane.b32.xlu0 %v332, 1
        %v338 = vpop.permute.xlu0 %337
        %vm339 = vcmask 7168
        %v340 = vsel %vm339, %v334, %v336
        %v341 = vsel %vm339, %v336, %v338
        %v344 = vsel %vm325, %v340, 0.0
        %v345 = vsel %vm326, %v341, 0.0
        %v348 = vrot.slane %v345, 4
        %v349 = vsel %vm319, %v344, %v348
        %v351 = vmax.f32 %v322, %v349
        %v352 = vsel %vm247, 1, 0
        %v353 = vsel %vm248, 1, 0
        %vm354 = vcmp.eq.s32.totalorder %v352, 1
        %vm355 = vcmp.eq.s32.totalorder %v353, 1
        %356 = vst [vmem:[#allocation1] ss:$2 sm:$0xff] %v289
        %s357 = scalar_lea.vmem [#allocation1], 16
        %358 = vst [vmem:[%s357] ss:$2 sm:$0xff] %v290
        %v359 = vld.sshfl [vmem:[#allocation1 + $0x8] sm:$0xff pattern:$0x75316420]
        %v360 = vld.sshfl [vmem:[#allocation1 + $0x10] sm:$0xff pattern:$0x75316420]
        %v361 = vld.sshfl [vmem:[#allocation1 + $0x18] sm:$0xff pattern:$0x75316420]
        %362 = vrot.lane.b32.xlu0 %v359, 126
        %v363 = vpop.permute.xlu0 %362
        %364 = vrot.lane.b32.xlu0 %v360, 126
        %v365 = vpop.permute.xlu0 %364
        %366 = vrot.lane.b32.xlu0 %v361, 126
        %v367 = vpop.permute.xlu0 %366
        %vm368 = vcmask 1031168
        %v369 = vsel %vm368, %v363, %v365
        %v370 = vsel %vm368, %v365, %v367
        %v373 = vsel %vm354, %v369, 0.0
        %v374 = vsel %vm355, %v370, 0.0
        %v377 = vrot.slane %v374, 4
        %v378 = vsel %vm319, %v373, %v377
        %v380 = vmax.f32 %v351, %v378
        %v381 = vsel %vm217, 1, 0
        %v382 = vsel %vm218, 1, 0
        %vm383 = vcmp.eq.s32.totalorder %v381, 1
        %vm384 = vcmp.eq.s32.totalorder %v382, 1
        %385 = vst [vmem:[#allocation1] ss:$2 sm:$0xff] %v289
        %s386 = scalar_lea.vmem [#allocation1], 16
        %387 = vst [vmem:[%s386] ss:$2 sm:$0xff] %v290
        %v388 = vld.sshfl [vmem:[#allocation1] sm:$0xff pattern:$0x75316420]
        %v389 = vld.sshfl [vmem:[#allocation1 + $0x8] sm:$0xff pattern:$0x75316420]
        %v390 = vld.sshfl [vmem:[#allocation1 + $0x10] sm:$0xff pattern:$0x75316420]
        %391 = vrot.lane.b32.xlu0 %v388, 2
        %v392 = vpop.permute.xlu0 %391
        %393 = vrot.lane.b32.xlu0 %v389, 2
        %v394 = vpop.permute.xlu0 %393
        %395 = vrot.lane.b32.xlu0 %v390, 2
        %v396 = vpop.permute.xlu0 %395
        %vm397 = vcmask 15360
        %v398 = vsel %vm397, %v392, %v394
        %v399 = vsel %vm397, %v394, %v396
        %v402 = vsel %vm383, %v398, 0.0
        %v403 = vsel %vm384, %v399, 0.0
        %v406 = vrot.slane %v403, 4
        %v407 = vsel %vm319, %v402, %v406
        %v409 = vmax.f32 %v380, %v407
        %v410 = vsel %vm257, 1, 0
        %v411 = vsel %vm258, 1, 0
        %vm412 = vcmp.eq.s32.totalorder %v410, 1
        %vm413 = vcmp.eq.s32.totalorder %v411, 1
        %414 = vst [vmem:[#allocation1] ss:$2 sm:$0xff] %v289
        %s415 = scalar_lea.vmem [#allocation1], 16
        %416 = vst [vmem:[%s415] ss:$2 sm:$0xff] %v290
        %v417 = vld.sshfl [vmem:[#allocation1 + $0x8] sm:$0xff pattern:$0x75316420]
        %v418 = vld.sshfl [vmem:[#allocation1 + $0x10] sm:$0xff pattern:$0x75316420]
        %v419 = vld.sshfl [vmem:[#allocation1 + $0x18] sm:$0xff pattern:$0x75316420]
        %420 = vrot.lane.b32.xlu0 %v417, 125
        %v421 = vpop.permute.xlu0 %420
        %422 = vrot.lane.b32.xlu0 %v418, 125
        %v423 = vpop.permute.xlu0 %422
        %424 = vrot.lane.b32.xlu0 %v419, 125
        %v425 = vpop.permute.xlu0 %424
        %vm426 = vcmask 1022976
        %v427 = vsel %vm426, %v421, %v423
        %v428 = vsel %vm426, %v423, %v425
        %v431 = vsel %vm412, %v427, 0.0
        %v432 = vsel %vm413, %v428, 0.0
        %v435 = vrot.slane %v432, 4
        %v436 = vsel %vm319, %v431, %v435
        %v438 = vmax.f32 %v409, %v436
        %v439 = vsel %vm207, 1, 0
        %v440 = vsel %vm208, 1, 0
        %vm441 = vcmp.eq.s32.totalorder %v439, 1
        %vm442 = vcmp.eq.s32.totalorder %v440, 1
        %443 = vst [vmem:[#allocation1] ss:$2 sm:$0xff] %v289
        %s444 = scalar_lea.vmem [#allocation1], 16
        %445 = vst [vmem:[%s444] ss:$2 sm:$0xff] %v290
        %v446 = vld.sshfl [vmem:[#allocation1] sm:$0xff pattern:$0x75316420]
        %v447 = vld.sshfl [vmem:[#allocation1 + $0x8] sm:$0xff pattern:$0x75316420]
        %v448 = vld.sshfl [vmem:[#allocation1 + $0x10] sm:$0xff pattern:$0x75316420]
        %449 = vrot.lane.b32.xlu0 %v446, 3
        %v450 = vpop.permute.xlu0 %449
        %451 = vrot.lane.b32.xlu0 %v447, 3
        %v452 = vpop.permute.xlu0 %451
        %453 = vrot.lane.b32.xlu0 %v448, 3
        %v454 = vpop.permute.xlu0 %453
        %vm455 = vcmask 23552
        %v456 = vsel %vm455, %v450, %v452
        %v457 = vsel %vm455, %v452, %v454
        %v460 = vsel %vm441, %v456, 0.0
        %v461 = vsel %vm442, %v457, 0.0
        %v464 = vrot.slane %v461, 4
        %v465 = vsel %vm319, %v460, %v464
        %v467 = vmax.f32 %v438, %v465
        %v468 = vsel %vm267, 1, 0
        %v469 = vsel %vm268, 1, 0
        %vm470 = vcmp.eq.s32.totalorder %v468, 1
        %vm471 = vcmp.eq.s32.totalorder %v469, 1
        %472 = vst [vmem:[#allocation1] ss:$2 sm:$0xff] %v289
        %s473 = scalar_lea.vmem [#allocation1], 16
        %474 = vst [vmem:[%s473] ss:$2 sm:$0xff] %v290
        %v475 = vld.sshfl [vmem:[#allocation1 + $0x8] sm:$0xff pattern:$0x75316420]
        %v476 = vld.sshfl [vmem:[#allocation1 + $0x10] sm:$0xff pattern:$0x75316420]
        %v477 = vld.sshfl [vmem:[#allocation1 + $0x18] sm:$0xff pattern:$0x75316420]
        %478 = vrot.lane.b32.xlu0 %v475, 124
        %v479 = vpop.permute.xlu0 %478
        %480 = vrot.lane.b32.xlu0 %v476, 124
        %v481 = vpop.permute.xlu0 %480
        %482 = vrot.lane.b32.xlu0 %v477, 124
        %v483 = vpop.permute.xlu0 %482
        %vm484 = vcmask 1014784
        %v485 = vsel %vm484, %v479, %v481
        %v486 = vsel %vm484, %v481, %v483
        %v489 = vsel %vm470, %v485, 0.0
        %v490 = vsel %vm471, %v486, 0.0
        %v493 = vrot.slane %v490, 4
        %v494 = vsel %vm319, %v489, %v493
        %v496 = vmax.f32 %v467, %v494
        %v497 = vsel %vm197, 1, 0
        %v498 = vsel %vm198, 1, 0
        %vm499 = vcmp.eq.s32.totalorder %v497, 1
        %vm500 = vcmp.eq.s32.totalorder %v498, 1
        %501 = vst [vmem:[#allocation1] ss:$2 sm:$0xff] %v289
        %s502 = scalar_lea.vmem [#allocation1], 16
        %503 = vst [vmem:[%s502] ss:$2 sm:$0xff] %v290
        %v504 = vld.sshfl [vmem:[#allocation1] sm:$0xff pattern:$0x75316420]
        %v505 = vld.sshfl [vmem:[#allocation1 + $0x8] sm:$0xff pattern:$0x75316420]
        %v506 = vld.sshfl [vmem:[#allocation1 + $0x10] sm:$0xff pattern:$0x75316420]
        %507 = vrot.lane.b32.xlu0 %v504, 4
        %v508 = vpop.permute.xlu0 %507
        %509 = vrot.lane.b32.xlu0 %v505, 4
        %v510 = vpop.permute.xlu0 %509
        %511 = vrot.lane.b32.xlu0 %v506, 4
        %v512 = vpop.permute.xlu0 %511
        %vm513 = vcmask 31744
        %v514 = vsel %vm513, %v508, %v510
        %v515 = vsel %vm513, %v510, %v512
        %v518 = vsel %vm499, %v514, 0.0
        %v519 = vsel %vm500, %v515, 0.0
        %v522 = vrot.slane %v519, 4
        %v523 = vsel %vm319, %v518, %v522
        %v525 = vmax.f32 %v496, %v523
        %v526 = vsel %vm277, 1, 0
        %v527 = vsel %vm278, 1, 0
        %vm528 = vcmp.eq.s32.totalorder %v526, 1
        %vm529 = vcmp.eq.s32.totalorder %v527, 1
        %530 = vst [vmem:[#allocation1] ss:$2 sm:$0xff] %v289
        %s531 = scalar_lea.vmem [#allocation1], 16
        %532 = vst [vmem:[%s531] ss:$2 sm:$0xff] %v290
        %v533 = vld.sshfl [vmem:[#allocation1 + $0x8] sm:$0xff pattern:$0x75316420]
        %v534 = vld.sshfl [vmem:[#allocation1 + $0x10] sm:$0xff pattern:$0x75316420]
        %v535 = vld.sshfl [vmem:[#allocation1 + $0x18] sm:$0xff pattern:$0x75316420]
        %536 = vrot.lane.b32.xlu0 %v533, 123
        %v537 = vpop.permute.xlu0 %536
        %538 = vrot.lane.b32.xlu0 %v534, 123
        %v539 = vpop.permute.xlu0 %538
        %540 = vrot.lane.b32.xlu0 %v535, 123
        %v541 = vpop.permute.xlu0 %540
        %vm542 = vcmask 1006592
        %v543 = vsel %vm542, %v537, %v539
        %v544 = vsel %vm542, %v539, %v541
        %v547 = vsel %vm528, %v543, 0.0
        %v548 = vsel %vm529, %v544, 0.0
        %v551 = vrot.slane %v548, 4
        %v552 = vsel %vm319, %v547, %v551
        %v554 = vmax.f32 %v525, %v552
        %v555 = vsel %vm187, 1, 0
        %v556 = vsel %vm188, 1, 0
        %vm557 = vcmp.eq.s32.totalorder %v555, 1
        %vm558 = vcmp.eq.s32.totalorder %v556, 1
        %559 = vst [vmem:[#allocation1] ss:$2 sm:$0xff] %v289
        %s560 = scalar_lea.vmem [#allocation1], 16
        %561 = vst [vmem:[%s560] ss:$2 sm:$0xff] %v290
        %v562 = vld.sshfl [vmem:[#allocation1] sm:$0xff pattern:$0x75316420]
        %v563 = vld.sshfl [vmem:[#allocation1 + $0x8] sm:$0xff pattern:$0x75316420]
        %v564 = vld.sshfl [vmem:[#allocation1 + $0x10] sm:$0xff pattern:$0x75316420]
        %565 = vrot.lane.b32.xlu0 %v562, 5
        %v566 = vpop.permute.xlu0 %565
        %567 = vrot.lane.b32.xlu0 %v563, 5
        %v568 = vpop.permute.xlu0 %567
        %569 = vrot.lane.b32.xlu0 %v564, 5
        %v570 = vpop.permute.xlu0 %569
        %vm571 = vcmask 39936
        %v572 = vsel %vm571, %v566, %v568
        %v573 = vsel %vm571, %v568, %v570
        %v576 = vsel %vm557, %v572, 0.0
        %v577 = vsel %vm558, %v573, 0.0
        %v580 = vrot.slane %v577, 4
        %v581 = vsel %vm319, %v576, %v580
        %v583 = vmax.f32 %v554, %v581
        %v584 = vsel %vm287, 1, 0
        %v585 = vsel %vm288, 1, 0
        %vm586 = vcmp.eq.s32.totalorder %v584, 1
        %vm587 = vcmp.eq.s32.totalorder %v585, 1
        %588 = vst [vmem:[#allocation1] ss:$2 sm:$0xff] %v289
        %s589 = scalar_lea.vmem [#allocation1], 16
        %590 = vst [vmem:[%s589] ss:$2 sm:$0xff] %v290
        %v591 = vld.sshfl [vmem:[#allocation1 + $0x8] sm:$0xff pattern:$0x75316420]
        %v592 = vld.sshfl [vmem:[#allocation1 + $0x10] sm:$0xff pattern:$0x75316420]
        %v593 = vld.sshfl [vmem:[#allocation1 + $0x18] sm:$0xff pattern:$0x75316420]
        %594 = vrot.lane.b32.xlu0 %v591, 122
        %v595 = vpop.permute.xlu0 %594
        %596 = vrot.lane.b32.xlu0 %v592, 122
        %v597 = vpop.permute.xlu0 %596
        %598 = vrot.lane.b32.xlu0 %v593, 122
        %v599 = vpop.permute.xlu0 %598
        %vm600 = vcmask 998400
        %v601 = vsel %vm600, %v595, %v597
        %v602 = vsel %vm600, %v597, %v599
        %v605 = vsel %vm586, %v601, 0.0
        %v606 = vsel %vm587, %v602, 0.0
        %v609 = vrot.slane %v606, 4
        %v610 = vsel %vm319, %v605, %v609
        %v612 = vmax.f32 %v583, %v610
        %v613 = vsel %vm177, 1, 0
        %v614 = vsel %vm178, 1, 0
        %vm615 = vcmp.eq.s32.totalorder %v613, 1
        %vm616 = vcmp.eq.s32.totalorder %v614, 1
        %617 = vst [vmem:[#allocation1] ss:$2 sm:$0xff] %v289
        %s618 = scalar_lea.vmem [#allocation1], 16
        %619 = vst [vmem:[%s618] ss:$2 sm:$0xff] %v290
        %v620 = vld.sshfl [vmem:[#allocation1] sm:$0xff pattern:$0x75316420]
        %v621 = vld.sshfl [vmem:[#allocation1 + $0x8] sm:$0xff pattern:$0x75316420]
        %v622 = vld.sshfl [vmem:[#allocation1 + $0x10] sm:$0xff pattern:$0x75316420]
        %623 = vrot.lane.b32.xlu0 %v620, 6
        %v624 = vpop.permute.xlu0 %623
        %625 = vrot.lane.b32.xlu0 %v621, 6
        %v626 = vpop.permute.xlu0 %625
        %627 = vrot.lane.b32.xlu0 %v622, 6
        %v628 = vpop.permute.xlu0 %627
        %vm629 = vcmask 48128
        %v630 = vsel %vm629, %v624, %v626
        %v631 = vsel %vm629, %v626, %v628
        %v634 = vsel %vm615, %v630, 0.0
        %v635 = vsel %vm616, %v631, 0.0
        %v638 = vrot.slane %v635, 4
        %v639 = vsel %vm319, %v634, %v638
        %v641 = vmax.f32 %v612, %v639
        %642 = vst [vmem:[#allocation2 + $0x4] sm:$0xff] %v409
        %v643 = vld [vmem:[#allocation2] sm:$0xff]
        %v644 = vld [vmem:[#allocation2 + $0x8] sm:$0xff]
        %647 = vrot.lane.b32.xlu0 %v643, 112
        %v648 = vpop.permute.xlu0 %647
        %649 = vrot.lane.b32.xlu0 %v644, 112
        %v650 = vpop.permute.xlu0 %649
        %v651 = vrot.slane %v648, 4
        %v652 = vrot.slane %v650, 4
        %v653 = vsel %vm319, %v651, %v652
        %vm654 = vcmask 916480
        %v655 = vsel %vm654, %v653, %v650
        %657 = vrot.lane.b32.xlu0 %v643, 16
        %v658 = vpop.permute.xlu0 %657
        %659 = vrot.lane.b32.xlu0 %v644, 16
        %v660 = vpop.permute.xlu0 %659
        %v661 = vrot.slane %v658, 4
        %v662 = vrot.slane %v660, 4
        %v663 = vsel %vm319, %v661, %v662
        %vm664 = vcmask 130048
        %v665 = vsel %vm664, %v658, %v663
        %v667 = vmax.f32 %v655, %v665
        %v668 = vmax.f32 %v409, %v667
        %669 = vrot.lane.b32.xlu0 %v643, 96
        %v670 = vpop.permute.xlu0 %669
        %671 = vrot.lane.b32.xlu0 %v644, 96
        %v672 = vpop.permute.xlu0 %671
        %v673 = vrot.slane %v670, 4
        %v674 = vrot.slane %v672, 4
        %v675 = vsel %vm319, %v673, %v674
        %vm676 = vcmask 785408
        %v677 = vsel %vm676, %v675, %v672
        %679 = vrot.lane.b32.xlu0 %v643, 32
        %v680 = vpop.permute.xlu0 %679
        %681 = vrot.lane.b32.xlu0 %v644, 32
        %v682 = vpop.permute.xlu0 %681
        %v683 = vrot.slane %v680, 4
        %v684 = vrot.slane %v682, 4
        %v685 = vsel %vm319, %v683, %v684
        %vm686 = vcmask 261120
        %v687 = vsel %vm686, %v680, %v685
        %v689 = vmax.f32 %v677, %v687
        %v690 = vmax.f32 %v668, %v689
        %s691 = scalar_lea.vmem %s152, 8 [#allocation6]
        %692 = vst [vmem:[%s691] sm:$0xff] %v690
        %693 = vst [vmem:[#allocation2 + $0x4] sm:$0xff] %v525
        %v694 = vld [vmem:[#allocation2] sm:$0xff]
        %v695 = vld [vmem:[#allocation2 + $0x8] sm:$0xff]
        %698 = vrot.lane.b32.xlu0 %v694, 112
        %v699 = vpop.permute.xlu0 %698
        %700 = vrot.lane.b32.xlu0 %v695, 112
        %v701 = vpop.permute.xlu0 %700
        %v702 = vrot.slane %v699, 4
        %v703 = vrot.slane %v701, 4
        %v704 = vsel %vm319, %v702, %v703
        %v705 = vsel %vm654, %v704, %v701
        %707 = vrot.lane.b32.xlu0 %v694, 16
        %v708 = vpop.permute.xlu0 %707
        %709 = vrot.lane.b32.xlu0 %v695, 16
        %v710 = vpop.permute.xlu0 %709
        %v711 = vrot.slane %v708, 4
        %v712 = vrot.slane %v710, 4
        %v713 = vsel %vm319, %v711, %v712
        %v714 = vsel %vm664, %v708, %v713
        %v716 = vmax.f32 %v705, %v714
        %v717 = vmax.f32 %v525, %v716
        %718 = vrot.lane.b32.xlu0 %v694, 96
        %v719 = vpop.permute.xlu0 %718
        %720 = vrot.lane.b32.xlu0 %v695, 96
        %v721 = vpop.permute.xlu0 %720
        %v722 = vrot.slane %v719, 4
        %v723 = vrot.slane %v721, 4
        %v724 = vsel %vm319, %v722, %v723
        %v725 = vsel %vm676, %v724, %v721
        %727 = vrot.lane.b32.xlu0 %v694, 32
        %v728 = vpop.permute.xlu0 %727
        %729 = vrot.lane.b32.xlu0 %v695, 32
        %v730 = vpop.permute.xlu0 %729
        %v731 = vrot.slane %v728, 4
        %v732 = vrot.slane %v730, 4
        %v733 = vsel %vm319, %v731, %v732
        %v734 = vsel %vm686, %v728, %v733
        %v736 = vmax.f32 %v725, %v734
        %v737 = vmax.f32 %v717, %v736
        %738 = vrot.lane.b32.xlu0 %v694, 80
        %v739 = vpop.permute.xlu0 %738
        %740 = vrot.lane.b32.xlu0 %v695, 80
        %v741 = vpop.permute.xlu0 %740
        %v742 = vrot.slane %v739, 4
        %v743 = vrot.slane %v741, 4
        %v744 = vsel %vm319, %v742, %v743
        %vm745 = vcmask 654336
        %v746 = vsel %vm745, %v744, %v741
        %748 = vrot.lane.b32.xlu0 %v694, 48
        %v749 = vpop.permute.xlu0 %748
        %750 = vrot.lane.b32.xlu0 %v695, 48
        %v751 = vpop.permute.xlu0 %750
        %v752 = vrot.slane %v749, 4
        %v753 = vrot.slane %v751, 4
        %v754 = vsel %vm319, %v752, %v753
        %vm755 = vcmask 392192
        %v756 = vsel %vm755, %v749, %v754
        %v758 = vmax.f32 %v746, %v756
        %v759 = vmax.f32 %v737, %v758
        %760 = vrot.lane.b32.xlu0 %v694, 64
        %v761 = vpop.permute.xlu0 %760
        %762 = vrot.lane.b32.xlu0 %v695, 64
        %v763 = vpop.permute.xlu0 %762
        %v764 = vrot.slane %v761, 4
        %v765 = vrot.slane %v763, 4
        %v766 = vsel %vm319, %v764, %v765
        %vm767 = vcmask 523264
        %v768 = vsel %vm767, %v766, %v763
        %v770 = vsel %vm767, %v761, %v766
        %v772 = vmax.f32 %v768, %v770
        %v773 = vmax.f32 %v759, %v772
        %s774 = scalar_lea.vmem %s152, 16 [#allocation6]
        %775 = vst [vmem:[%s774] sm:$0xff] %v773
        %776 = vst [vmem:[#allocation2 + $0x4] sm:$0xff] %v641
        %v777 = vld [vmem:[#allocation2] sm:$0xff]
        %v778 = vld [vmem:[#allocation2 + $0x8] sm:$0xff]
        %781 = vrot.lane.b32.xlu0 %v777, 112
        %v782 = vpop.permute.xlu0 %781
        %783 = vrot.lane.b32.xlu0 %v778, 112
        %v784 = vpop.permute.xlu0 %783
        %v785 = vrot.slane %v782, 4
        %v786 = vrot.slane %v784, 4
        %v787 = vsel %vm319, %v785, %v786
        %v788 = vsel %vm654, %v787, %v784
        %790 = vrot.lane.b32.xlu0 %v777, 16
        %v791 = vpop.permute.xlu0 %790
        %792 = vrot.lane.b32.xlu0 %v778, 16
        %v793 = vpop.permute.xlu0 %792
        %v794 = vrot.slane %v791, 4
        %v795 = vrot.slane %v793, 4
        %v796 = vsel %vm319, %v794, %v795
        %v797 = vsel %vm664, %v791, %v796
        %v799 = vmax.f32 %v788, %v797
        %v800 = vmax.f32 %v641, %v799
        %801 = vrot.lane.b32.xlu0 %v777, 96
        %v802 = vpop.permute.xlu0 %801
        %803 = vrot.lane.b32.xlu0 %v778, 96
        %v804 = vpop.permute.xlu0 %803
        %v805 = vrot.slane %v802, 4
        %v806 = vrot.slane %v804, 4
        %v807 = vsel %vm319, %v805, %v806
        %v808 = vsel %vm676, %v807, %v804
        %810 = vrot.lane.b32.xlu0 %v777, 32
        %v811 = vpop.permute.xlu0 %810
        %812 = vrot.lane.b32.xlu0 %v778, 32
        %v813 = vpop.permute.xlu0 %812
        %v814 = vrot.slane %v811, 4
        %v815 = vrot.slane %v813, 4
        %v816 = vsel %vm319, %v814, %v815
        %v817 = vsel %vm686, %v811, %v816
        %v819 = vmax.f32 %v808, %v817
        %v820 = vmax.f32 %v800, %v819
        %821 = vrot.lane.b32.xlu0 %v777, 80
        %v822 = vpop.permute.xlu0 %821
        %823 = vrot.lane.b32.xlu0 %v778, 80
        %v824 = vpop.permute.xlu0 %823
        %v825 = vrot.slane %v822, 4
        %v826 = vrot.slane %v824, 4
        %v827 = vsel %vm319, %v825, %v826
        %v828 = vsel %vm745, %v827, %v824
        %830 = vrot.lane.b32.xlu0 %v777, 48
        %v831 = vpop.permute.xlu0 %830
        %832 = vrot.lane.b32.xlu0 %v778, 48
        %v833 = vpop.permute.xlu0 %832
        %v834 = vrot.slane %v831, 4
        %v835 = vrot.slane %v833, 4
        %v836 = vsel %vm319, %v834, %v835
        %v837 = vsel %vm755, %v831, %v836
        %v839 = vmax.f32 %v828, %v837
        %v840 = vmax.f32 %v820, %v839
        %841 = vrot.lane.b32.xlu0 %v777, 64
        %v842 = vpop.permute.xlu0 %841
        %843 = vrot.lane.b32.xlu0 %v778, 64
        %v844 = vpop.permute.xlu0 %843
        %v845 = vrot.slane %v842, 4
        %v846 = vrot.slane %v844, 4
        %v847 = vsel %vm319, %v845, %v846
        %v848 = vsel %vm767, %v847, %v844
        %v850 = vsel %vm767, %v842, %v847
        %v852 = vmax.f32 %v848, %v850
        %v853 = vmax.f32 %v840, %v852
        %v854 = vsel %vm755, %v836, %v833
        %v856 = vsel %vm745, %v822, %v827
        %v858 = vmax.f32 %v854, %v856
        %v859 = vmax.f32 %v853, %v858
        %v860 = vsel %vm686, %v816, %v813
        %v862 = vsel %vm676, %v802, %v807
        %v864 = vmax.f32 %v860, %v862
        %v865 = vmax.f32 %v859, %v864
        %s866 = scalar_lea.vmem %s152, 24 [#allocation6]
        %867 = vst [vmem:[%s866] sm:$0xff] %v865
        %s868 = sand.u32 %s68, 1
        %s869 = scalar_lea.sflag [#allocation5], %s868
        %s870 = sand.u32 %s68, 1
        %s871 = smul.addr %s870, 32
        %s872 = scalar_lea.vmem [#allocation6], %s871
        // Predicated region
        $region29: #{tpu_custom_call.1} parent=23 // pred_check
          %p873 = pneg %p78
        $region30: #{tpu_custom_call.1} parent=23 // pred_check_branch
          %875 = sbr.rel (%p873) target = $region32
        $region31: #{tpu_custom_call.1} parent=23 // pred_region
          %877 = vsyncadd %s869, 0
          %s878 = smul.addr %s23, 2
          %s879 = smul.addr %s22, 8
          %s880 = sadd.s32 %s878, %s879
          %s881 = smul.addr %s880, 4
          %s882 = scalar_lea.hbm %s1, %s881
          %s883 = sshll.u32 %s872, 4
          %s884 = int_to_ptr.vmem [resolvable:$true] %s883
          %s885 = sshll.u32 %s882, 4
          %s886 = int_to_ptr.hbm [resolvable:$true] %s885
          %891 = dma.vmem_to_hbm [thread:$0]  %s884, 512, %s886, %s869, 128, 128, 8
        $region32: #{tpu_custom_call.1} parent=23 // pred_fallthru
          _
      $region24: #{tpu_custom_call.1} parent=5 // pred_fallthru
        _
      %p892 = scmp.le.s32.totalorder 2, %s13
      // Predicated region
      $region33: #{tpu_custom_call.1} parent=5 // pred_check
        %p893 = pneg %p892
      $region34: #{tpu_custom_call.1} parent=5 // pred_check_branch
        %895 = sbr.rel (%p893) target = $region36
      $region35: #{tpu_custom_call.1} parent=5 // pred_region
        %s896 = ssub.s32 %s13, 2
        // Predicated region
        $region37: #{tpu_custom_call.1} parent=35 // pred_check
          %p897 = pneg %p84
        $region38: #{tpu_custom_call.1} parent=35 // pred_check_branch
          %899 = sbr.rel (%p897) target = $region40
        $region39: #{tpu_custom_call.1} parent=35 // pred_region
          %s900 = sand.u32 %s69, 1
          %s901 = scalar_lea.sflag [#allocation5], %s900
          %s902 = sand.u32 %s69, 1
          %s903 = smul.addr %s902, 32
          %s904 = scalar_lea.vmem [#allocation6], %s903
          %906 = dma.done %s901, 512
        $region40: #{tpu_custom_call.1} parent=35 // pred_fallthru
          _
      $region36: #{tpu_custom_call.1} parent=5 // pred_fallthru
        _
    $region6: #{tpu_custom_call.1} parent=1 // loop_footer
      %s17 = sadd.s32 1, %s13
    $region7: #{tpu_custom_call.1} parent=1 // loop_footer_branch
      %12 = sbr.rel target = $region3
    $region8: #{tpu_custom_call.1} parent=1 // loop_exit
      _
    %907 = vsyncpa [#allocation4], 1
    %s908 = scalar_lea.sflag [#allocation4], 1
    %909 = vsyncpa %s908, 1
    %910 = vsyncpa [#allocation5], 1
    %s911 = scalar_lea.sflag [#allocation5], 1
    %912 = vsyncpa %s911, 1

</llo_original>
